<compile_context>
chip_gen: v7x
topology: tpu7x:2x2x1
jax: 0.10.0
libtpu: 0.0.40
codegen_flags: <defaults>
</compile_context>

<pallas_src>
import functools
import math

import jax
import jax.numpy as jnp
from jax.experimental import pallas as pl
from jax.experimental.pallas import tpu as pltpu


def _label_smoothing_kernel(
    x_ref, tgt_ref, out_ref, *,
    n_rows, v_total, tile_m, tile_v,
    padding_idx, confidence, smooth_val, row_entropy,
    mask_cols, compute_dtype,
):
    """Grid point (i, j): rows tile i ("parallel"), vocab tile j ("arbitrary")."""
    i = pl.program_id(0)
    j = pl.program_id(1)
    nv = pl.num_programs(1)

    @pl.when(j == 0)
    def _init():
        out_ref[...] = jnp.zeros_like(out_ref)

    tgt = tgt_ref[...]                         # (tile_m, 1) int32
    # Shift the scalars instead of the per-element iota (saves a VALU add/elem).
    tgt_local = tgt - j * tile_v               # (tile_m, 1)
    conf_c = jnp.asarray(confidence, compute_dtype)
    smooth_c = jnp.asarray(smooth_val, compute_dtype)

    def accumulate(mask_tail_cols):
        x = x_ref[...]                         # (tile_m, tile_v), native dtype
        if x.dtype != compute_dtype:
            x = x.astype(compute_dtype)
        col = jax.lax.broadcasted_iota(jnp.int32, (tile_m, tile_v), 1)
        if mask_tail_cols:
            # Only the final vocab tile can have out-of-range columns. Zero x
            # there (not just the weight) so stale/NaN edge reads can't leak.
            valid_cols = v_total - j * tile_v
            x = jnp.where(col < valid_cols, x, jnp.asarray(0, compute_dtype))
        # Fused weight: confidence at the target column, smooth elsewhere
        # (padding column corrected separately below).
        w = jnp.where(col == tgt_local, conf_c, smooth_c)
        out_ref[...] += -jnp.sum((w * x).astype(jnp.float32), axis=1,
                                 keepdims=True)

    if mask_cols:  # static Python bool: tile_v doesn't divide V
        @pl.when(j < nv - 1)
        def _steady():
            accumulate(False)

        @pl.when(j == nv - 1)
        def _tail():
            accumulate(True)
    else:
        accumulate(False)

    # Padding column has weight 0, not smooth: add back smooth * x[:, pad] on
    # the single tile that contains it.
    pad_tile, pad_col = divmod(padding_idx, tile_v)   # static ints

    @pl.when(j == pad_tile)
    def _pad_fix():
        x_pad = x_ref[:, pad_col:pad_col + 1].astype(jnp.float32)   # (tile_m, 1)
        out_ref[...] += smooth_val * x_pad

    @pl.when(j == nv - 1)
    def _finalize():
        rows = i * tile_m + jax.lax.broadcasted_iota(jnp.int32, (tile_m, 1), 0)
        valid = (tgt != padding_idx) & (rows < n_rows)
        out_ref[...] = jnp.where(valid, out_ref[...] + row_entropy, 0.0)


def _vmem_budget():
    """(x_tile_budget_bytes, vmem_limit_bytes), generation-aware."""
    cap = None
    try:
        info = pltpu.get_tpu_info()
        cap = getattr(info, "vmem_capacity_bytes", None) or \
              getattr(info, "vmem_size_bytes", None)
    except Exception:
        cap = None
    if cap is not None and cap >= 100 * 1024 * 1024:
        # v5e / v6e: 128 MiB physical VMEM — bigger tiles, fewer grid steps.
        return 20 * 1024 * 1024, 96 * 1024 * 1024
    # v7x (64 MiB physical) or unknown: keep 2 pipeline buffers well under limit.
    return 12 * 1024 * 1024, 48 * 1024 * 1024


def _has_bf16_valu():
    """v5e has no bf16 VALU path; keep the immediate f32 upcast there."""
    try:
        kind = jax.devices()[0].device_kind.lower()
    except Exception:
        return True
    return not any(tag in kind for tag in ("v5e", "v5 lite", "v5lite"))


def _choose_tiles(n, v, itemsize, budget_bytes):
    """Pick (tile_m, tile_v): ~budget_bytes per x tile, lane-dense last dim."""
    sub = 16 if itemsize < 4 else 8            # sublane packing for bf16 vs f32
    if v * itemsize * sub <= budget_bytes:
        tile_v = v                             # full rows fit the budget
    else:
        tile_v = max(128, ((budget_bytes // (sub * itemsize)) // 128) * 128)
    tile_m = max(sub, (budget_bytes // (tile_v * itemsize) // sub) * sub)
    n_rounded = ((n + sub - 1) // sub) * sub
    # Ensure >= 2 row tiles when rows allow it so the "parallel" row axis can
    # span both v7x TensorCores (harmless ~0.35us extra step on v5e/v6e).
    if n_rounded >= 2 * sub:
        half = (((n + 1) // 2 + sub - 1) // sub) * sub
        tile_m = min(tile_m, half)
    tile_m = min(tile_m, n_rounded)
    return tile_m, tile_v


def label_smoothing_loss(x, target, *, size, padding_idx, smoothing,
                         tile_m=None, tile_v=None):
    """Pallas-backed equivalent of LabelSmoothing(size, padding_idx, smoothing)(x, target)."""
    n, v = x.shape
    assert v == size, "x.shape[1] must equal `size`"

    confidence = 1.0 - smoothing
    smooth_val = smoothing / (size - 2)
    # Per-row entropy constant sum(td * log(td)) for a valid row (trace-time).
    row_entropy = 0.0
    if confidence > 0.0:
        row_entropy += confidence * math.log(confidence)
    if smooth_val > 0.0:
        row_entropy += (size - 2) * smooth_val * math.log(smooth_val)

    x_budget, vmem_limit = _vmem_budget()
    itemsize = jnp.dtype(x.dtype).itemsize
    auto_m, auto_v = _choose_tiles(n, v, itemsize, budget_bytes=x_budget)
    tile_m = auto_m if tile_m is None else tile_m
    tile_v = auto_v if tile_v is None else tile_v

    # Elementwise domain: packed bf16 on bf16-capable VALUs, else f32.
    compute_dtype = jnp.float32
    if jnp.dtype(x.dtype) == jnp.dtype(jnp.bfloat16) and _has_bf16_valu():
        compute_dtype = jnp.bfloat16

    n_row_tiles = pl.cdiv(n, tile_m)
    n_v_tiles = pl.cdiv(v, tile_v)
    n_padded = n_row_tiles * tile_m

    tgt2d = target.astype(jnp.int32).reshape(n, 1)

    kernel = functools.partial(
        _label_smoothing_kernel,
        n_rows=n, v_total=v, tile_m=tile_m, tile_v=tile_v,
        padding_idx=padding_idx, confidence=confidence, smooth_val=smooth_val,
        row_entropy=row_entropy, mask_cols=(v % tile_v) != 0,
        compute_dtype=compute_dtype,
    )

    per_row = pl.pallas_call(
        kernel,
        out_shape=jax.ShapeDtypeStruct((n_padded, 1), jnp.float32),
        grid_spec=pltpu.PrefetchScalarGridSpec(
            num_scalar_prefetch=0,
            grid=(n_row_tiles, n_v_tiles),
            in_specs=[
                pl.BlockSpec((tile_m, tile_v), lambda i, j: (i, j)),  # x tile
                pl.BlockSpec((tile_m, 1), lambda i, j: (i, 0)),       # targets
            ],
            # Per-row partial losses; resident across the vocab (reduction)
            # axis, distinct block per row tile -> safe with "parallel" rows.
            out_specs=pl.BlockSpec((tile_m, 1), lambda i, j: (i, 0)),
        ),
        compiler_params=pltpu.CompilerParams(
            dimension_semantics=("parallel", "arbitrary"),
            vmem_limit_bytes=vmem_limit,
        ),
    )(x, tgt2d)
    return jnp.sum(per_row)


def _reference_loss(x, target, *, size, padding_idx, smoothing):
    """Pure-JAX reference mirroring the PyTorch module, for validation."""
    confidence = 1.0 - smoothing
    smooth_val = smoothing / (size - 2)
    col = jnp.arange(size)[None, :]
    tgt = target[:, None]
    td = jnp.where(col == tgt, confidence, smooth_val).astype(jnp.float32)
    td = jnp.where(col == padding_idx, 0.0, td)
    td = jnp.where(tgt == padding_idx, 0.0, td)
    safe_log = jnp.log(jnp.where(td > 0.0, td, 1.0))
    return jnp.sum(jnp.where(td > 0.0, td * (safe_log - x.astype(jnp.float32)), 0.0))


if __name__ == "__main__":
    # TODO(synk): the module's forward starts with print(target); exit(0) — the
    # debug early-exit is intentionally not reproduced; the loss path is implemented.
    key = jax.random.PRNGKey(0)

    # Case 1: small shapes consistent with the module (vocab=16, 16 tokens),
    # auto tile selection (exercises sub-128 full-row blocks + megacore split).
    SIZE, PADDING_IDX, SMOOTHING, N = 16, 0, 0.1, 16
    kx, kt, key = jax.random.split(key, 3)
    logits = jax.random.normal(kx, (N, SIZE), dtype=jnp.float32)
    x = jax.nn.log_softmax(logits, axis=-1)                   # KLDivLoss expects log-probs
    target = jax.random.randint(kt, (N,), 0, SIZE, dtype=jnp.int32)
    target = target.at[3].set(PADDING_IDX).at[11].set(PADDING_IDX)

    loss = label_smoothing_loss(x, target, size=SIZE, padding_idx=PADDING_IDX,
                                smoothing=SMOOTHING)
    loss = jax.block_until_ready(loss)
    ref = _reference_loss(x, target, size=SIZE, padding_idx=PADDING_IDX,
                          smoothing=SMOOTHING)
    assert jnp.allclose(loss, ref, rtol=1e-5, atol=1e-5), (loss, ref)

    # Case 2: vocab tiling + vocab-axis accumulator + row-remainder mask
    # (n=20 not a multiple of tile_m=8; V=256 split into 2 tiles, no col mask).
    SIZE2, N2 = 256, 20
    kx2, kt2, key = jax.random.split(key, 3)
    logits2 = jax.random.normal(kx2, (N2, SIZE2), dtype=jnp.float32)
    x2 = jax.nn.log_softmax(logits2, axis=-1)
    target2 = jax.random.randint(kt2, (N2,), 0, SIZE2, dtype=jnp.int32)
    target2 = target2.at[1].set(PADDING_IDX).at[17].set(PADDING_IDX)

    loss2 = label_smoothing_loss(x2, target2, size=SIZE2, padding_idx=PADDING_IDX,
                                 smoothing=SMOOTHING, tile_m=8, tile_v=128)
    loss2 = jax.block_until_ready(loss2)
    ref2 = _reference_loss(x2, target2, size=SIZE2, padding_idx=PADDING_IDX,
                           smoothing=SMOOTHING)
    assert jnp.allclose(loss2, ref2, rtol=1e-5, atol=1e-4), (loss2, ref2)

    # Case 3: non-128-multiple vocab split across tiles (last-tile column mask),
    # non-zero padding_idx that lives in an interior vocab tile.
    SIZE3, N3, PAD3 = 1000, 24, 600
    kx3, kt3, key = jax.random.split(key, 3)
    logits3 = jax.random.normal(kx3, (N3, SIZE3), dtype=jnp.float32)
    x3 = jax.nn.log_softmax(logits3, axis=-1)
    target3 = jax.random.randint(kt3, (N3,), 0, SIZE3, dtype=jnp.int32)
    target3 = target3.at[2].set(PAD3).at[13].set(PAD3)

    loss3 = label_smoothing_loss(x3, target3, size=SIZE3, padding_idx=PAD3,
                                 smoothing=SMOOTHING, tile_m=8, tile_v=256)
    loss3 = jax.block_until_ready(loss3)
    ref3 = _reference_loss(x3, target3, size=SIZE3, padding_idx=PAD3,
                           smoothing=SMOOTHING)
    assert jnp.allclose(loss3, ref3, rtol=1e-5, atol=1e-3), (loss3, ref3)

    # Case 4: bf16 input streamed natively (packed-bf16 elementwise path on
    # v6e/v7x, f32 path on v5e); looser tolerance for bf16 weight/product rounding.
    SIZE4, N4 = 512, 32
    kx4, kt4 = jax.random.split(key)
    logits4 = jax.random.normal(kx4, (N4, SIZE4), dtype=jnp.float32)
    x4 = jax.nn.log_softmax(logits4, axis=-1).astype(jnp.bfloat16)
    target4 = jax.random.randint(kt4, (N4,), 0, SIZE4, dtype=jnp.int32)
    target4 = target4.at[0].set(PADDING_IDX).at[21].set(PADDING_IDX)

    loss4 = label_smoothing_loss(x4, target4, size=SIZE4, padding_idx=PADDING_IDX,
                                 smoothing=SMOOTHING)
    loss4 = jax.block_until_ready(loss4)
    ref4 = _reference_loss(x4.astype(jnp.float32), target4, size=SIZE4,
                           padding_idx=PADDING_IDX, smoothing=SMOOTHING)
    assert jnp.allclose(loss4, ref4, rtol=2e-2, atol=2.0), (loss4, ref4)

    print("KERNEL_OK")
</pallas_src>

<mosaic_0001>
module attributes {stable_mosaic.version = 11 : i64} {
  func.func @_label_smoothing_kernel(%arg0: i32, %arg1: i32, %arg2: memref<8x16xf32, #tpu.memory_space<vmem>>, %arg3: memref<8x1xi32, #tpu.memory_space<vmem>>, %arg4: memref<8x1xf32, #tpu.memory_space<vmem>>) attributes {dimension_semantics = [#tpu.dimension_semantics<parallel>, #tpu.dimension_semantics<arbitrary>], iteration_bounds = array<i64: 2, 1>, scalar_prefetch = 0 : i64, scratch_operands = 0 : i64, tpu.core_type = #tpu.core_type<tc>, window_params = [{transform_indices = @transform_0, window_bounds = array<i64: 8, 16>}, {transform_indices = @transform_1, window_bounds = array<i64: 8, 1>}, {transform_indices = @transform_2, window_bounds = array<i64: 8, 1>}]} {
    %c0_i32 = arith.constant 0 : i32
    %0 = arith.cmpi eq, %arg1, %c0_i32 : i32
    %1 = arith.extui %0 : i1 to i32
    %c0_i32_0 = arith.constant 0 : i32
    %2 = arith.cmpi ne, %1, %c0_i32_0 : i32
    scf.if %2 {
      %cst_15 = arith.constant 0.000000e+00 : f32
      %28 = vector.broadcast %cst_15 : f32 to vector<8x1xf32>
      %c0_16 = arith.constant 0 : index
      %c0_17 = arith.constant 0 : index
      %29 = vector.load %arg4[%c0_16, %c0_17] : memref<8x1xf32, #tpu.memory_space<vmem>>, vector<8x1xf32>
      tpu.vector_store %arg4[%c0_16, %c0_17], %28 {strides = array<i32>} : memref<8x1xf32, #tpu.memory_space<vmem>>, vector<8x1xf32>,
    } else {
    }
    %c0 = arith.constant 0 : index
    %c0_1 = arith.constant 0 : index
    %3 = vector.load %arg3[%c0, %c0_1] : memref<8x1xi32, #tpu.memory_space<vmem>>, vector<8x1xi32>
    %c16_i32 = arith.constant 16 : i32
    %4 = arith.muli %arg1, %c16_i32 : i32
    %5 = vector.broadcast %4 : i32 to vector<8x1xi32>
    %6 = arith.subi %3, %5 : vector<8x1xi32>
    %c0_2 = arith.constant 0 : index
    %c0_3 = arith.constant 0 : index
    %7 = vector.load %arg2[%c0_2, %c0_3] : memref<8x16xf32, #tpu.memory_space<vmem>>, vector<8x16xf32>
    %8 = tpu.iota {dimensions = array<i32: 1>} : vector<8x16xi32>
    %9 = vector.broadcast %6 : vector<8x1xi32> to vector<8x16xi32>
    %10 = arith.cmpi eq, %8, %9 : vector<8x16xi32>
    %cst = arith.constant 0.899999976 : f32
    %cst_4 = arith.constant 0.00714285718 : f32
    %11 = vector.broadcast %cst : f32 to vector<8x16xf32>
    %12 = vector.broadcast %cst_4 : f32 to vector<8x16xf32>
    %13 = arith.select %10, %11, %12 : vector<8x16xi1>, vector<8x16xf32>
    %c0_5 = arith.constant 0 : index
    %c0_6 = arith.constant 0 : index
    %14 = vector.load %arg4[%c0_5, %c0_6] : memref<8x1xf32, #tpu.memory_space<vmem>>, vector<8x1xf32>
    %15 = arith.mulf %13, %7 : vector<8x16xf32>
    %cst_7 = arith.constant dense<0.000000e+00> : vector<8xf32>
    %16 = vector.multi_reduction <add>, %15, %cst_7 [1] : vector<8x16xf32> to vector<8xf32>
    %17 = vector.shape_cast %16 : vector<8xf32> to vector<8x1xf32>
    %cst_8 = arith.constant 0.000000e+00 : f32
    %18 = vector.broadcast %cst_8 : f32 to vector<8x1xf32>
    %19 = arith.subf %18, %17 : vector<8x1xf32>
    %20 = arith.addf %14, %19 : vector<8x1xf32>
    %c0_9 = arith.constant 0 : index
    %c0_10 = arith.constant 0 : index
    %21 = vector.load %arg4[%c0_9, %c0_10] : memref<8x1xf32, #tpu.memory_space<vmem>>, vector<8x1xf32>
    tpu.vector_store %arg4[%c0_9, %c0_10], %20 {strides = array<i32>} : memref<8x1xf32, #tpu.memory_space<vmem>>, vector<8x1xf32>,
    %c0_i32_11 = arith.constant 0 : i32
    %22 = arith.cmpi eq, %arg1, %c0_i32_11 : i32
    %23 = arith.extui %22 : i1 to i32
    %c0_i32_12 = arith.constant 0 : i32
    %24 = arith.cmpi ne, %23, %c0_i32_12 : i32
    scf.if %24 {
      %c0_15 = arith.constant 0 : index
      %c0_16 = arith.constant 0 : index
      %28 = vector.load %arg2[%c0_15, %c0_16] : memref<8x16xf32, #tpu.memory_space<vmem>>, vector<8x1xf32>
      %c0_17 = arith.constant 0 : index
      %c0_18 = arith.constant 0 : index
      %29 = vector.load %arg4[%c0_17, %c0_18] : memref<8x1xf32, #tpu.memory_space<vmem>>, vector<8x1xf32>
      %cst_19 = arith.constant 0.00714285718 : f32
      %30 = vector.broadcast %cst_19 : f32 to vector<8x1xf32>
      %31 = arith.mulf %30, %28 : vector<8x1xf32>
      %32 = arith.addf %29, %31 : vector<8x1xf32>
      %c0_20 = arith.constant 0 : index
      %c0_21 = arith.constant 0 : index
      %33 = vector.load %arg4[%c0_20, %c0_21] : memref<8x1xf32, #tpu.memory_space<vmem>>, vector<8x1xf32>
      tpu.vector_store %arg4[%c0_20, %c0_21], %32 {strides = array<i32>} : memref<8x1xf32, #tpu.memory_space<vmem>>, vector<8x1xf32>,
    } else {
    }
    %c0_i32_13 = arith.constant 0 : i32
    %25 = arith.cmpi eq, %arg1, %c0_i32_13 : i32
    %26 = arith.extui %25 : i1 to i32
    %c0_i32_14 = arith.constant 0 : i32
    %27 = arith.cmpi ne, %26, %c0_i32_14 : i32
    scf.if %27 {
      %c8_i32 = arith.constant 8 : i32
      %28 = arith.muli %arg0, %c8_i32 : i32
      %29 = tpu.iota {dimensions = array<i32: 0>} : vector<8x1xi32>
      %30 = vector.broadcast %28 : i32 to vector<8x1xi32>
      %31 = arith.addi %30, %29 : vector<8x1xi32>
      %c0_i32_15 = arith.constant 0 : i32
      %32 = vector.broadcast %c0_i32_15 : i32 to vector<8x1xi32>
      %33 = arith.cmpi ne, %3, %32 : vector<8x1xi32>
      %c16_i32_16 = arith.constant 16 : i32
      %34 = vector.broadcast %c16_i32_16 : i32 to vector<8x1xi32>
      %35 = arith.cmpi slt, %31, %34 : vector<8x1xi32>
      %36 = arith.andi %33, %35 : vector<8x1xi1>
      %c0_17 = arith.constant 0 : index
      %c0_18 = arith.constant 0 : index
      %37 = vector.load %arg4[%c0_17, %c0_18] : memref<8x1xf32, #tpu.memory_space<vmem>>, vector<8x1xf32>
      %cst_19 = arith.constant -0.588988721 : f32
      %38 = vector.broadcast %cst_19 : f32 to vector<8x1xf32>
      %39 = arith.addf %37, %38 : vector<8x1xf32>
      %cst_20 = arith.constant 0.000000e+00 : f32
      %40 = vector.broadcast %cst_20 : f32 to vector<8x1xf32>
      %41 = arith.select %36, %39, %40 : vector<8x1xi1>, vector<8x1xf32>
      %c0_21 = arith.constant 0 : index
      %c0_22 = arith.constant 0 : index
      %42 = vector.load %arg4[%c0_21, %c0_22] : memref<8x1xf32, #tpu.memory_space<vmem>>, vector<8x1xf32>
      tpu.vector_store %arg4[%c0_21, %c0_22], %41 {strides = array<i32>} : memref<8x1xf32, #tpu.memory_space<vmem>>, vector<8x1xf32>,
    } else {
    }
    return
  }
  func.func @transform_0(%arg0: i32, %arg1: i32) -> (i32, i32) {
    %c0_i32 = arith.constant 0 : i32
    return %arg0, %arg1 : i32, i32
  }
  func.func @transform_1(%arg0: i32, %arg1: i32) -> (i32, i32) {
    %c0_i32 = arith.constant 0 : i32
    %c0_i32_0 = arith.constant 0 : i32
    return %arg0, %c0_i32 : i32, i32
  }
  func.func @transform_2(%arg0: i32, %arg1: i32) -> (i32, i32) {
    %c0_i32 = arith.constant 0 : i32
    %c0_i32_0 = arith.constant 0 : i32
    return %arg0, %c0_i32 : i32, i32
  }
}

</mosaic_0001>

<llo_original>
// kernel: tpu_custom_call.1
$region0: #{tpu_custom_call.1}
  #allocation0 [shape = 'u32[]', space=smem, size = 0x4, offset = 0x4, fixed_abs, tag = 'smem constant byte address 0x4 - core index']
  #allocation1 [shape = 'u32[144,128]{1,0:T(1,128)}', space=vmem, size = 0x12000, scoped, tag = 'internal scratch']
  %s0 = inlined_call_operand.vmem [shape: f32[16,16], index: 0, kind: input, shape index: {}]
  %s1 = inlined_call_operand.vmem [shape: s32[16,1], index: 1, kind: input, shape index: {}]
  %s2 = inlined_call_operand.vmem [shape: f32[16,1], index: 2, kind: output, shape index: {}]
  %s3 = sld [smem:[#allocation0]]
  $region49: #{tpu_custom_call.1} parent=0
    _
  %s5 = ssub.s32 1, %s3
  %s6 = scalar_select 0, %s5, %s3
  loop: start=0, step=1, limit=4
  $region2: #{tpu_custom_call.1} parent=0 // loop_pre_header
    _
  $region3: #{tpu_custom_call.1} parent=0 // loop_header
    %s8 = sphi 0, %s12
    %p9 = scmp.ge.s32.totalorder %s8, 4
    %s15 = sphi 0, %s27
    %s16 = sphi 0, %s23
    %s17 = sphi 0, %s15
    %s18 = sphi 0, %s16
    %s19 = sphi 0, %s17
    %s20 = sphi 0, %s18
    %s32 = sphi 0, %s34
    %s35 = sphi 0, %s32
    %s36 = sphi 0, %s35
    %s52 = sphi 0, %s36
    %s58 = sphi 0, %s60
    %s61 = sphi 0, %s58
    %s62 = sphi 0, %s61
    %s78 = sphi 0, %s62
    %s84 = sphi 0, %s86
    %s87 = sphi 0, %s84
    %s88 = sphi 0, %s87
    %s104 = sphi 0, %s88
  $region4: #{tpu_custom_call.1} parent=0 // loop_header_branch
    %11 = sbr.rel (%p9) target = $region8
  $region5: #{tpu_custom_call.1} parent=0 // loop_body
    %s13 = ssub.s32 %s8, 1
    %s14 = ssub.s32 %s8, 2
    %s21 = sadd.s32 1, %s16
    %p22 = scmp.ge.s32.totalorder %s21, 1
    %s23 = scalar_select %p22, 0, %s21
    %s24 = sadd.s32 1, %s15
    %s25 = scalar_select %p22, %s24, %s15
    %p26 = scmp.ge.s32.totalorder %s25, 2
    %s27 = scalar_select %p26, 0, %s25
    %s28 = ssub.s32 %s15, %s27
    %s29 = ssub.s32 %s16, %s23
    %s30 = sor.u32 %s28, %s29
    %p31 = scmp.eq.s32.totalorder %s30, 0
    %s33 = sadd.s32 %s32, 1
    %s34 = scalar_select %p31, %s32, %s33
    %p37 = pneg %p31
    %p38 = scmp.eq.s32.totalorder %s8, 1
    %p39 = por %p37, %p38
    %p40 = scmp.ne.s32.totalorder %s32, %s35
    %p41 = scmp.eq.s32.totalorder %s8, 0
    %p42 = por %p40, %p41
    %p43 = scmp.ne.s32.totalorder %s32, %s35
    %p44 = scmp.eq.s32.totalorder %s13, 1
    %p45 = por %p43, %p44
    %p46 = scmp.ne.s32.totalorder %s35, %s36
    %p47 = scmp.eq.s32.totalorder %s13, 0
    %p48 = por %p46, %p47
    %p49 = scmp.ne.s32.totalorder %s35, %s36
    %p50 = scmp.eq.s32.totalorder %s14, 1
    %p51 = por %p49, %p50
    %p53 = scmp.ne.s32.totalorder %s36, %s52
    %p54 = scmp.eq.s32.totalorder %s14, 0
    %p55 = por %p53, %p54
    %s56 = ssub.s32 %s15, %s27
    %p57 = scmp.eq.s32.totalorder %s56, 0
    %s59 = sadd.s32 %s58, 1
    %s60 = scalar_select %p57, %s58, %s59
    %p63 = pneg %p57
    %p64 = scmp.eq.s32.totalorder %s8, 1
    %p65 = por %p63, %p64
    %p66 = scmp.ne.s32.totalorder %s58, %s61
    %p67 = scmp.eq.s32.totalorder %s8, 0
    %p68 = por %p66, %p67
    %p69 = scmp.ne.s32.totalorder %s58, %s61
    %p70 = scmp.eq.s32.totalorder %s13, 1
    %p71 = por %p69, %p70
    %p72 = scmp.ne.s32.totalorder %s61, %s62
    %p73 = scmp.eq.s32.totalorder %s13, 0
    %p74 = por %p72, %p73
    %p75 = scmp.ne.s32.totalorder %s61, %s62
    %p76 = scmp.eq.s32.totalorder %s14, 1
    %p77 = por %p75, %p76
    %p79 = scmp.ne.s32.totalorder %s62, %s78
    %p80 = scmp.eq.s32.totalorder %s14, 0
    %p81 = por %p79, %p80
    %s82 = ssub.s32 %s15, %s27
    %p83 = scmp.eq.s32.totalorder %s82, 0
    %s85 = sadd.s32 %s84, 1
    %s86 = scalar_select %p83, %s84, %s85
    %p89 = pneg %p83
    %p90 = scmp.eq.s32.totalorder %s8, 1
    %p91 = por %p89, %p90
    %p92 = scmp.ne.s32.totalorder %s84, %s87
    %p93 = scmp.eq.s32.totalorder %s8, 0
    %p94 = por %p92, %p93
    %p95 = scmp.ne.s32.totalorder %s84, %s87
    %p96 = scmp.eq.s32.totalorder %s13, 1
    %p97 = por %p95, %p96
    %p98 = scmp.ne.s32.totalorder %s87, %s88
    %p99 = scmp.eq.s32.totalorder %s13, 0
    %p100 = por %p98, %p99
    %p101 = scmp.ne.s32.totalorder %s87, %s88
    %p102 = scmp.eq.s32.totalorder %s14, 1
    %p103 = por %p101, %p102
    %p105 = scmp.ne.s32.totalorder %s88, %s104
    %p106 = scmp.eq.s32.totalorder %s14, 0
    %p107 = por %p105, %p106
    %p108 = scmp.le.s32.totalorder 1, %s8
    %p109 = scmp.lt.s32.totalorder %s8, 3
    %p110 = pnand %p108, %p109
    %p111 = pneg %p110
    // Predicated region
    $region9: #{tpu_custom_call.1} parent=5 // pred_check
      _
    $region10: #{tpu_custom_call.1} parent=5 // pred_check_branch
      %113 = sbr.rel (%p110) target = $region12
    $region11: #{tpu_custom_call.1} parent=5 // pred_region
      %s114 = ssub.s32 %s8, 1
    $region12: #{tpu_custom_call.1} parent=5 // pred_fallthru
      _
    %p115 = scmp.lt.s32.totalorder %s8, 2
    // Predicated region
    $region13: #{tpu_custom_call.1} parent=5 // pred_check
      %p116 = pneg %p115
    $region14: #{tpu_custom_call.1} parent=5 // pred_check_branch
      %118 = sbr.rel (%p116) target = $region16
    $region15: #{tpu_custom_call.1} parent=5 // pred_region
      // Predicated region
      $region17: #{tpu_custom_call.1} parent=15 // pred_check
        %p119 = pneg %p42
      $region18: #{tpu_custom_call.1} parent=15 // pred_check_branch
        %121 = sbr.rel (%p119) target = $region20
      $region19: #{tpu_custom_call.1} parent=15 // pred_region
        %p122 = scmp.lt.s32.totalorder %s15, 1
        %s123 = scalar_select %p122, %s15, 1
        %p124 = scmp.lt.s32.totalorder %s16, 0
        %s125 = scalar_select %p124, %s16, 0
        %s126 = sadd.s32 %s125, %s123
        %s127 = smul.addr %s126, 8
        %s128 = scalar_lea.vmem %s0, %s127
      $region20: #{tpu_custom_call.1} parent=15 // pred_fallthru
        _
      // Predicated region
      $region21: #{tpu_custom_call.1} parent=15 // pred_check
        %p129 = pneg %p68
      $region22: #{tpu_custom_call.1} parent=15 // pred_check_branch
        %131 = sbr.rel (%p129) target = $region24
      $region23: #{tpu_custom_call.1} parent=15 // pred_region
        %p132 = scmp.lt.s32.totalorder %s15, 1
        %s133 = scalar_select %p132, %s15, 1
        %s134 = smul.addr %s133, 8
        %s135 = scalar_lea.vmem %s1, %s134
      $region24: #{tpu_custom_call.1} parent=15 // pred_fallthru
        _
    $region16: #{tpu_custom_call.1} parent=5 // pred_fallthru
      _
    %p136 = scmp.le.s32.totalorder 1, %s8
    %p137 = scmp.lt.s32.totalorder %s8, 3
    %p138 = pnand %p136, %p137
    %p139 = pneg %p138
    // Predicated region
    $region25: #{tpu_custom_call.1} parent=5 // pred_check
      _
    $region26: #{tpu_custom_call.1} parent=5 // pred_check_branch
      %141 = sbr.rel (%p138) target = $region28
    $region27: #{tpu_custom_call.1} parent=5 // pred_region
      %s142 = ssub.s32 %s8, 1
      %p143 = scmp.lt.s32.totalorder %s17, 1
      %s144 = scalar_select %p143, %s17, 1
      %p145 = scmp.lt.s32.totalorder %s18, 0
      %s146 = scalar_select %p145, %s18, 0
      %s147 = sadd.s32 %s146, %s144
      %s148 = smul.addr %s147, 8
      %s149 = scalar_lea.vmem %s0, %s148
      %p150 = pneg %p48
      %p151 = pneg %p45
      %p152 = scmp.lt.s32.totalorder %s17, 1
      %s153 = scalar_select %p152, %s17, 1
      %s154 = smul.addr %s153, 8
      %s155 = scalar_lea.vmem %s1, %s154
      %p156 = pneg %p74
      %p157 = pneg %p71
      %p158 = pneg %p100
      %p159 = pneg %p97
      %p160 = scmp.lt.s32.totalorder %s17, 1
      %s161 = scalar_select %p160, %s17, 1
      %s162 = smul.addr %s161, 8
      %s163 = scalar_lea.vmem %s2, %s162
      %p164 = scmp.lt.s32.totalorder %s17, 1
      %s165 = scalar_select %p164, %s17, 1
      %p166 = scmp.lt.s32.totalorder %s18, 0
      %s167 = scalar_select %p166, %s18, 0
      %s168 = sadd.s32 %s167, %s165
      %s169 = smul.addr %s168, 8
      %s170 = scalar_lea.vmem %s0, %s169
      %p171 = scmp.lt.s32.totalorder %s17, 1
      %s172 = scalar_select %p171, %s17, 1
      %s173 = smul.addr %s172, 8
      %s174 = scalar_lea.vmem %s1, %s173
      %p175 = scmp.lt.s32.totalorder %s17, 1
      %s176 = scalar_select %p175, %s17, 1
      %s177 = smul.addr %s176, 8
      %s178 = scalar_lea.vmem %s2, %s177
      %p179 = scmp.eq.s32.totalorder %s18, 0
      // Predicated region
      $region29: #{tpu_custom_call.1} parent=27 // pred_check
        %p180 = pneg %p179
      $region30: #{tpu_custom_call.1} parent=27 // pred_check_branch
        %182 = sbr.rel (%p180) target = $region32
      $region31: #{tpu_custom_call.1} parent=27 // pred_region
        %vm183 = vcmask 7168
        %184 = vst.msk [vmem:[%s178] sm:$0xff] %vm183, 0.0
      $region32: #{tpu_custom_call.1} parent=27 // pred_fallthru
        _
      %v185 = vld [vmem:[%s174] sm:$0xff]
      %s186 = smul.u32 %s18, 16
      %v187 = vstv %s186
      %v188 = vsub.s32 %v185, %v187
      %v189 = vld [vmem:[%s170] sm:$0xff]
      %v190 = vlaneseq
      %v191 = vand.u32 %v190, 127
      %192 = vset.pattern.permute.xlu0 0
      %193 = vperm.xlu0 %192, %v188
      %v194 = vpop.permute.xlu0 %193
      %vm195 = vcmp.eq.s32.totalorder %v191, %v194
      %v196 = vsel %vm195, 0.9, 0.007142857
      %v197 = vld [vmem:[%s178] sm:$0xff]
      %v198 = vmul.f32 %v196, %v189
      %vm199 = vcmask 130048
      %v200 = vsel %vm199, %v198, 0.0
      %201 = vadd.xlane.f32.xlu0 %v200
      %v202 = vpop.xlane.xlu0 %201
      %v203 = vsub.f32 0.0, %v202
      %v204 = vadd.f32 %v197, %v203
      %vm205 = vcmask 7168
      %206 = vst.msk [vmem:[%s178] sm:$0xff] %vm205, %v204
      // Predicated region
      $region33: #{tpu_custom_call.1} parent=27 // pred_check
        %p207 = pneg %p179
      $region34: #{tpu_custom_call.1} parent=27 // pred_check_branch
        %209 = sbr.rel (%p207) target = $region36
      $region35: #{tpu_custom_call.1} parent=27 // pred_region
        %v210 = vld [vmem:[%s170] sm:$0xff]
        %v211 = vld [vmem:[%s178] sm:$0xff]
        %v212 = vmul.f32 %v210, 0.007142857
        %v213 = vadd.f32 %v211, %v212
        %214 = vst.msk [vmem:[%s178] sm:$0xff] %vm205, %v213
        %s215 = smul.u32 %s17, 8
        %v216 = vlaneseq
        %v217 = vshrl.u32 %v216, 7
        %v218 = vstv %s215
        %v219 = vadd.s32 %v218, %v217
        %vm220 = vcmp.ne.s32.totalorder %v185, 0
        %vm221 = vcmp.lt.s32.totalorder %v219, 16
        %vm222 = vmand %vm220, %vm221
        %v223 = vld [vmem:[%s178] sm:$0xff]
        %v224 = vadd.f32 %v223, -0.5889887
        %v225 = vsel %vm222, %v224, 0.0
        %226 = vst.msk [vmem:[%s178] sm:$0xff] %vm205, %v225
      $region36: #{tpu_custom_call.1} parent=27 // pred_fallthru
        _
      %p227 = scmp.lt.s32.totalorder %s17, 1
      %s228 = scalar_select %p227, %s17, 1
      %s229 = smul.addr %s228, 8
      %s230 = scalar_lea.vmem %s2, %s229
      // Predicated region
      $region37: #{tpu_custom_call.1} parent=27 // pred_check
        %p231 = pneg %p97
      $region38: #{tpu_custom_call.1} parent=27 // pred_check_branch
        %233 = sbr.rel (%p231) target = $region40
      $region39: #{tpu_custom_call.1} parent=27 // pred_region
        _
      $region40: #{tpu_custom_call.1} parent=27 // pred_fallthru
        _
    $region28: #{tpu_custom_call.1} parent=5 // pred_fallthru
      _
    %p234 = scmp.le.s32.totalorder 2, %s8
    // Predicated region
    $region41: #{tpu_custom_call.1} parent=5 // pred_check
      %p235 = pneg %p234
    $region42: #{tpu_custom_call.1} parent=5 // pred_check_branch
      %237 = sbr.rel (%p235) target = $region44
    $region43: #{tpu_custom_call.1} parent=5 // pred_region
      %s238 = ssub.s32 %s8, 2
      // Predicated region
      $region45: #{tpu_custom_call.1} parent=43 // pred_check
        %p239 = pneg %p103
      $region46: #{tpu_custom_call.1} parent=43 // pred_check_branch
        %241 = sbr.rel (%p239) target = $region48
      $region47: #{tpu_custom_call.1} parent=43 // pred_region
        %p242 = scmp.lt.s32.totalorder %s19, 1
        %s243 = scalar_select %p242, %s19, 1
        %s244 = smul.addr %s243, 8
        %s245 = scalar_lea.vmem %s2, %s244
      $region48: #{tpu_custom_call.1} parent=43 // pred_fallthru
        _
    $region44: #{tpu_custom_call.1} parent=5 // pred_fallthru
      _
  $region6: #{tpu_custom_call.1} parent=0 // loop_footer
    %s12 = sadd.s32 1, %s8
  $region7: #{tpu_custom_call.1} parent=0 // loop_footer_branch
    %7 = sbr.rel target = $region3
  $region8: #{tpu_custom_call.1} parent=0 // loop_exit
    _

</llo_original>
